<compile_context>
chip_gen: v6e
topology: v6e:2x2x1
jax: 0.10.0
libtpu: 0.0.40
codegen_flags: <defaults>
</compile_context>

<pallas_src>
import math

import jax
import jax.numpy as jnp
from jax.experimental import pallas as pl
from jax.experimental.pallas import tpu as pltpu


TILE_N = 512  # batch rows per grid step (lane dim); f32 tile = 8*512*4 B = 16 KiB


def _binary_classifier_kernel(w_ref, b_ref, xT_ref, o_ref):
    # w_ref : (F, 1)      f32 VMEM, resident across the grid
    # b_ref : (1, 1)      f32 SMEM scalar
    # xT_ref: (F, TILE_N) f32 VMEM tile (batch in the lane dimension)
    # o_ref : (1, TILE_N) f32 VMEM tile (lane-dense output)
    xT = xT_ref[...]
    w = w_ref[...]                                  # (F, 1) broadcasts over lanes
    # VPU broadcast-mul + sublane reduce -> lane-dense (1, TILE_N) logits.
    logits = jnp.sum(xT * w, axis=0, keepdims=True) + b_ref[0, 0]
    # Numerically stable sigmoid; exp lands on the EUP slot.
    o_ref[...] = jax.nn.sigmoid(logits)


def binary_classifier(x, weight, bias, *, tile_n=TILE_N):
    """sigmoid(x @ weight.T + bias) with a batch-tiled, lane-dense Pallas kernel.

    x: (N, 8) float, weight: (1, 8) float, bias: (1,) float. Returns (N, 1) f32.
    """
    n, f = x.shape
    assert weight.shape == (1, f)

    x = x.astype(jnp.float32)
    w_col = weight.astype(jnp.float32).T                 # (F, 1), pre-oriented
    b_smem = jnp.asarray(bias, jnp.float32).reshape(1, 1)

    # Pad batch up to a multiple of tile_n; padded lanes are sliced off below.
    n_pad = ((n + tile_n - 1) // tile_n) * tile_n
    xT = jnp.pad(x.T, ((0, 0), (0, n_pad - n)))          # (F, n_pad)

    grid = (n_pad // tile_n,)
    out = pl.pallas_call(
        _binary_classifier_kernel,
        out_shape=jax.ShapeDtypeStruct((1, n_pad), jnp.float32),
        grid=grid,
        in_specs=[
            # Weight column: same block every step -> stays resident in VMEM.
            pl.BlockSpec((f, 1), lambda i: (0, 0)),
            # Bias: single scalar in SMEM (no VMEM double-buffer pair).
            pl.BlockSpec(memory_space=pltpu.MemorySpace.SMEM),
            # x^T tile: batch (lanes) marches with the grid.
            pl.BlockSpec((f, tile_n), lambda i: (0, i)),
        ],
        out_specs=pl.BlockSpec((1, tile_n), lambda i: (0, i)),
        compiler_params=pltpu.CompilerParams(
            dimension_semantics=("parallel",),
        ),
    )(w_col, b_smem, xT)

    # Layout plumbing back to nn.Linear's (N, 1) output.
    return out[0, :n].reshape(n, 1)


def _reference(x, weight, bias):
    return jax.nn.sigmoid(x @ weight.T + bias)


if __name__ == "__main__":
    key = jax.random.PRNGKey(0)
    k_x, k_w, k_b = jax.random.split(key, 3)

    batch, in_features, out_features = 2000, 8, 1  # non-multiple of TILE_N on purpose

    # Deterministic parameter init mimicking nn.Linear default:
    # uniform(-1/sqrt(in_features), 1/sqrt(in_features))
    bound = 1.0 / math.sqrt(in_features)
    weight = jax.random.uniform(
        k_w, (out_features, in_features), minval=-bound, maxval=bound,
        dtype=jnp.float32)
    bias = jax.random.uniform(
        k_b, (out_features,), minval=-bound, maxval=bound, dtype=jnp.float32)

    x = jax.random.normal(k_x, (batch, in_features), dtype=jnp.float32)

    out = binary_classifier(x, weight, bias)
    out = jax.block_until_ready(out)

    ref = _reference(x, weight, bias)
    assert out.shape == (batch, out_features)
    assert jnp.allclose(out, ref, atol=1e-5, rtol=1e-5), float(
        jnp.max(jnp.abs(out - ref)))

    print("KERNEL_OK")
</pallas_src>

<mosaic_0001>
module attributes {stable_mosaic.version = 11 : i64} {
  func.func @_binary_classifier_kernel(%arg0: i32, %arg1: memref<8x1xf32, #tpu.memory_space<vmem>>, %arg2: memref<1x1xf32, #tpu.memory_space<smem>>, %arg3: memref<8x512xf32, #tpu.memory_space<vmem>>, %arg4: memref<1x512xf32, #tpu.memory_space<vmem>>) attributes {dimension_semantics = [#tpu.dimension_semantics<parallel>], iteration_bounds = array<i64: 4>, scalar_prefetch = 0 : i64, scratch_operands = 0 : i64, tpu.core_type = #tpu.core_type<tc>, window_params = [{pipeline_mode = #tpu.pipeline_mode<synchronous>, transform_indices = @transform_0, window_bounds = array<i64: 8, 1>}, {transform_indices = @transform_1, window_bounds = array<i64: 1, 1>}, {transform_indices = @transform_2, window_bounds = array<i64: 8, 512>}, {transform_indices = @transform_3, window_bounds = array<i64: 1, 512>}]} {
    %c0 = arith.constant 0 : index
    %c0_0 = arith.constant 0 : index
    %0 = vector.load %arg3[%c0, %c0_0] : memref<8x512xf32, #tpu.memory_space<vmem>>, vector<8x512xf32>
    %c0_1 = arith.constant 0 : index
    %c0_2 = arith.constant 0 : index
    %1 = vector.load %arg1[%c0_1, %c0_2] : memref<8x1xf32, #tpu.memory_space<vmem>>, vector<8x1xf32>
    %2 = vector.broadcast %1 : vector<8x1xf32> to vector<8x512xf32>
    %3 = arith.mulf %0, %2 : vector<8x512xf32>
    %cst = arith.constant dense<0.000000e+00> : vector<512xf32>
    %4 = vector.multi_reduction <add>, %3, %cst [0] : vector<8x512xf32> to vector<512xf32>
    %5 = vector.shape_cast %4 : vector<512xf32> to vector<1x512xf32>
    %c0_3 = arith.constant 0 : index
    %c0_4 = arith.constant 0 : index
    %6 = memref.load %arg2[%c0_3, %c0_4] : memref<1x1xf32, #tpu.memory_space<smem>>
    %7 = vector.broadcast %6 : f32 to vector<1x512xf32>
    %8 = arith.addf %5, %7 : vector<1x512xf32>
    %9 = arith.negf %8 : vector<1x512xf32>
    %10 = math.exp %9 : vector<1x512xf32>
    %cst_5 = arith.constant 1.000000e+00 : f32
    %11 = vector.broadcast %cst_5 : f32 to vector<1x512xf32>
    %12 = arith.addf %11, %10 : vector<1x512xf32>
    %13 = arith.divf %11, %12 : vector<1x512xf32>
    %c0_6 = arith.constant 0 : index
    %c0_7 = arith.constant 0 : index
    %14 = vector.load %arg4[%c0_6, %c0_7] : memref<1x512xf32, #tpu.memory_space<vmem>>, vector<1x512xf32>
    tpu.vector_store %arg4[%c0_6, %c0_7], %13 {strides = array<i32>} : memref<1x512xf32, #tpu.memory_space<vmem>>, vector<1x512xf32>,
    return
  }
  func.func @transform_0(%arg0: i32) -> (i32, i32) {
    %c0_i32 = arith.constant 0 : i32
    %c0_i32_0 = arith.constant 0 : i32
    %c0_i32_1 = arith.constant 0 : i32
    return %c0_i32, %c0_i32_0 : i32, i32
  }
  func.func @transform_1(%arg0: i32) -> (i32, i32) {
    %c0_i32 = arith.constant 0 : i32
    %c0_i32_0 = arith.constant 0 : i32
    %c0_i32_1 = arith.constant 0 : i32
    return %c0_i32, %c0_i32_0 : i32, i32
  }
  func.func @transform_2(%arg0: i32) -> (i32, i32) {
    %c0_i32 = arith.constant 0 : i32
    %c0_i32_0 = arith.constant 0 : i32
    return %c0_i32, %arg0 : i32, i32
  }
  func.func @transform_3(%arg0: i32) -> (i32, i32) {
    %c0_i32 = arith.constant 0 : i32
    %c0_i32_0 = arith.constant 0 : i32
    return %c0_i32, %arg0 : i32, i32
  }
}

</mosaic_0001>

<llo_original>
// kernel: tpu_custom_call.1
$region0: #{tpu_custom_call.1}
  #allocation0 [shape = 'u32[]', space=smem, size = 0x4, offset = 0x4, fixed_abs, tag = 'smem constant byte address 0x4 - core index']
  #allocation1 [shape = 'u32[144,128]{1,0:T(1,128)}', space=vmem, size = 0x12000, scoped, tag = 'internal scratch']
  #allocation2 [shape = 'f32[1,1]{1,0:T(1,128)S(6)}', space=smem, size = 0x200, scoped, tag = 'scoped memory for tpu_custom_call.1']
  %s0 = inlined_call_operand.vmem [shape: f32[8,1], index: 0, kind: input, shape index: {}]
  %s1 = inlined_call_operand.<no memory space> [shape: f32[1,1], index: 1, kind: input, shape index: {}]
  %s2 = inlined_call_operand.hbm [shape: f32[8,2048], index: 2, kind: input, shape index: {}]
  %s3 = inlined_call_operand.hbm [shape: f32[1,2048], index: 3, kind: output, shape index: {}]
  %s4 = sld [smem:[#allocation0]]
  $region49: #{tpu_custom_call.1} parent=0
    _
  %s6 = ssub.s32 1, %s4
  %s7 = scalar_select 0, %s6, %s4
  %8 = sst [smem:[#allocation2]] %s1
  $region1: #{tpu_custom_call.1} parent=0
    #allocation3 [shape = 'u8[32768]{0}', space=vmem, size = 0x8000, scoped, tag = 'input window, operand 2']
    #allocation4 [shape = 's32[2]{0}', space=sflag, size = 0x8, scoped, tag = 'scoped memory for tpu_custom_call.1']
    #allocation5 [shape = 's32[2]{0}', space=sflag, size = 0x8, scoped, tag = 'scoped memory for tpu_custom_call.1']
    #allocation6 [shape = 'u8[4096]{0}', space=vmem, size = 0x1000, scoped, tag = 'output window, operand 0']
    %9 = vsyncpa [#allocation4], 0
    %s10 = scalar_lea.sflag [#allocation4], 1
    %11 = vsyncpa %s10, 0
    %12 = vsyncpa [#allocation5], 0
    %s13 = scalar_lea.sflag [#allocation5], 1
    %14 = vsyncpa %s13, 0
    loop: start=0, step=1, limit=6
    $region2: #{tpu_custom_call.1} parent=1 // loop_pre_header
      _
    $region3: #{tpu_custom_call.1} parent=1 // loop_header
      %s16 = sphi 0, %s20
      %p17 = scmp.ge.s32.totalorder %s16, 6
      %s24 = sphi 0, %s24
      %s26 = sphi 0, %s24
      %s27 = sphi 0, %s26
      %s41 = sphi 0, %s27
      %s45 = sphi 0, %s45
      %s47 = sphi 0, %s45
      %s48 = sphi 0, %s47
      %s62 = sphi 0, %s48
      %s68 = sphi 0, %s70
      %s71 = sphi 0, %s68
      %s72 = sphi 0, %s71
      %s88 = sphi 0, %s72
      %s94 = sphi 0, %s96
      %s97 = sphi 0, %s94
      %s98 = sphi 0, %s97
      %s114 = sphi 0, %s98
    $region4: #{tpu_custom_call.1} parent=1 // loop_header_branch
      %19 = sbr.rel (%p17) target = $region8
    $region5: #{tpu_custom_call.1} parent=1 // loop_body
      %s21 = ssub.s32 %s16, 1
      %s22 = ssub.s32 %s16, 2
      %s23 = sadd.s32 %s16, 1
      %s25 = sadd.s32 %s24, 1
      %p28 = scmp.eq.s32.totalorder %s16, 3
      %p29 = scmp.ne.s32.totalorder %s24, %s26
      %p30 = scmp.eq.s32.totalorder %s16, 0
      %p31 = por %p29, %p30
      %p32 = scmp.ne.s32.totalorder %s24, %s26
      %p33 = scmp.eq.s32.totalorder %s21, 3
      %p34 = por %p32, %p33
      %p35 = scmp.ne.s32.totalorder %s26, %s27
      %p36 = scmp.eq.s32.totalorder %s21, 0
      %p37 = por %p35, %p36
      %p38 = scmp.ne.s32.totalorder %s26, %s27
      %p39 = scmp.eq.s32.totalorder %s22, 3
      %p40 = por %p38, %p39
      %p42 = scmp.ne.s32.totalorder %s27, %s41
      %p43 = scmp.eq.s32.totalorder %s22, 0
      %p44 = por %p42, %p43
      %s46 = sadd.s32 %s45, 1
      %p49 = scmp.eq.s32.totalorder %s16, 3
      %p50 = scmp.ne.s32.totalorder %s45, %s47
      %p51 = scmp.eq.s32.totalorder %s16, 0
      %p52 = por %p50, %p51
      %p53 = scmp.ne.s32.totalorder %s45, %s47
      %p54 = scmp.eq.s32.totalorder %s21, 3
      %p55 = por %p53, %p54
      %p56 = scmp.ne.s32.totalorder %s47, %s48
      %p57 = scmp.eq.s32.totalorder %s21, 0
      %p58 = por %p56, %p57
      %p59 = scmp.ne.s32.totalorder %s47, %s48
      %p60 = scmp.eq.s32.totalorder %s22, 3
      %p61 = por %p59, %p60
      %p63 = scmp.ne.s32.totalorder %s48, %s62
      %p64 = scmp.eq.s32.totalorder %s22, 0
      %p65 = por %p63, %p64
      %s66 = ssub.s32 %s16, %s23
      %p67 = scmp.eq.s32.totalorder %s66, 0
      %s69 = sadd.s32 %s68, 1
      %s70 = scalar_select %p67, %s68, %s69
      %p73 = pneg %p67
      %p74 = scmp.eq.s32.totalorder %s16, 3
      %p75 = por %p73, %p74
      %p76 = scmp.ne.s32.totalorder %s68, %s71
      %p77 = scmp.eq.s32.totalorder %s16, 0
      %p78 = por %p76, %p77
      %p79 = scmp.ne.s32.totalorder %s68, %s71
      %p80 = scmp.eq.s32.totalorder %s21, 3
      %p81 = por %p79, %p80
      %p82 = scmp.ne.s32.totalorder %s71, %s72
      %p83 = scmp.eq.s32.totalorder %s21, 0
      %p84 = por %p82, %p83
      %p85 = scmp.ne.s32.totalorder %s71, %s72
      %p86 = scmp.eq.s32.totalorder %s22, 3
      %p87 = por %p85, %p86
      %p89 = scmp.ne.s32.totalorder %s72, %s88
      %p90 = scmp.eq.s32.totalorder %s22, 0
      %p91 = por %p89, %p90
      %s92 = ssub.s32 %s16, %s23
      %p93 = scmp.eq.s32.totalorder %s92, 0
      %s95 = sadd.s32 %s94, 1
      %s96 = scalar_select %p93, %s94, %s95
      %p99 = pneg %p93
      %p100 = scmp.eq.s32.totalorder %s16, 3
      %p101 = por %p99, %p100
      %p102 = scmp.ne.s32.totalorder %s94, %s97
      %p103 = scmp.eq.s32.totalorder %s16, 0
      %p104 = por %p102, %p103
      %p105 = scmp.ne.s32.totalorder %s94, %s97
      %p106 = scmp.eq.s32.totalorder %s21, 3
      %p107 = por %p105, %p106
      %p108 = scmp.ne.s32.totalorder %s97, %s98
      %p109 = scmp.eq.s32.totalorder %s21, 0
      %p110 = por %p108, %p109
      %p111 = scmp.ne.s32.totalorder %s97, %s98
      %p112 = scmp.eq.s32.totalorder %s22, 3
      %p113 = por %p111, %p112
      %p115 = scmp.ne.s32.totalorder %s98, %s114
      %p116 = scmp.eq.s32.totalorder %s22, 0
      %p117 = por %p115, %p116
      %p118 = scmp.le.s32.totalorder 1, %s16
      %p119 = scmp.lt.s32.totalorder %s16, 5
      %p120 = pnand %p118, %p119
      %p121 = pneg %p120
      // Predicated region
      $region9: #{tpu_custom_call.1} parent=5 // pred_check
        _
      $region10: #{tpu_custom_call.1} parent=5 // pred_check_branch
        %123 = sbr.rel (%p120) target = $region12
      $region11: #{tpu_custom_call.1} parent=5 // pred_region
        %s124 = ssub.s32 %s16, 1
        // Predicated region
        $region13: #{tpu_custom_call.1} parent=11 // pred_check
          %p125 = pneg %p37
        $region14: #{tpu_custom_call.1} parent=11 // pred_check_branch
          %127 = sbr.rel (%p125) target = $region16
        $region15: #{tpu_custom_call.1} parent=11 // pred_region
          _
        $region16: #{tpu_custom_call.1} parent=11 // pred_fallthru
          _
        // Predicated region
        $region17: #{tpu_custom_call.1} parent=11 // pred_check
          %p128 = pneg %p58
        $region18: #{tpu_custom_call.1} parent=11 // pred_check_branch
          %130 = sbr.rel (%p128) target = $region20
        $region19: #{tpu_custom_call.1} parent=11 // pred_region
          _
        $region20: #{tpu_custom_call.1} parent=11 // pred_fallthru
          _
      $region12: #{tpu_custom_call.1} parent=5 // pred_fallthru
        _
      %p131 = scmp.lt.s32.totalorder %s16, 4
      // Predicated region
      $region21: #{tpu_custom_call.1} parent=5 // pred_check
        %p132 = pneg %p131
      $region22: #{tpu_custom_call.1} parent=5 // pred_check_branch
        %134 = sbr.rel (%p132) target = $region24
      $region23: #{tpu_custom_call.1} parent=5 // pred_region
        // Predicated region
        $region25: #{tpu_custom_call.1} parent=23 // pred_check
          %p135 = pneg %p78
        $region26: #{tpu_custom_call.1} parent=23 // pred_check_branch
          %137 = sbr.rel (%p135) target = $region28
        $region27: #{tpu_custom_call.1} parent=23 // pred_region
          %s138 = sand.u32 %s68, 1
          %s139 = scalar_lea.sflag [#allocation4], %s138
          %s140 = sand.u32 %s68, 1
          %s141 = smul.addr %s140, 32
          %s142 = scalar_lea.vmem [#allocation3], %s141
          %s143 = smul.u32 4, %s16
          %s145 = ssub.s32 512, 512
          %146 = vsyncadd %s139, %s145
          %s147 = smul.addr %s143, 128
          %s148 = scalar_lea.hbm %s2, %s147
          %s150 = sshll.u32 %s142, 4
          %s151 = int_to_ptr.vmem [resolvable:$true] %s150
          %153 = dma.hbm_to_vmem [thread:$0]  %s148, 512, %s151, %s139
        $region28: #{tpu_custom_call.1} parent=23 // pred_fallthru
          _
      $region24: #{tpu_custom_call.1} parent=5 // pred_fallthru
        _
      %p154 = scmp.le.s32.totalorder 1, %s16
      %p155 = scmp.lt.s32.totalorder %s16, 5
      %p156 = pnand %p154, %p155
      %p157 = pneg %p156
      // Predicated region
      $region29: #{tpu_custom_call.1} parent=5 // pred_check
        _
      $region30: #{tpu_custom_call.1} parent=5 // pred_check_branch
        %159 = sbr.rel (%p156) target = $region32
      $region31: #{tpu_custom_call.1} parent=5 // pred_region
        %s160 = ssub.s32 %s16, 1
        %s161 = sand.u32 %s71, 1
        %s162 = scalar_lea.sflag [#allocation4], %s161
        %s163 = sand.u32 %s71, 1
        %s164 = smul.addr %s163, 32
        %s165 = scalar_lea.vmem [#allocation3], %s164
        // Predicated region
        $region33: #{tpu_custom_call.1} parent=31 // pred_check
          %p166 = pneg %p84
        $region34: #{tpu_custom_call.1} parent=31 // pred_check_branch
          %168 = sbr.rel (%p166) target = $region36
        $region35: #{tpu_custom_call.1} parent=31 // pred_region
          %169 = dma.done %s162, 512
        $region36: #{tpu_custom_call.1} parent=31 // pred_fallthru
          _
        %p170 = pneg %p37
        %p171 = pneg %p34
        %p172 = pneg %p58
        %p173 = pneg %p55
        %s174 = sand.u32 %s71, 1
        %s175 = scalar_lea.sflag [#allocation4], %s174
        %s176 = sand.u32 %s71, 1
        %s177 = smul.addr %s176, 32
        %s178 = scalar_lea.vmem [#allocation3], %s177
        %p179 = pneg %p84
        %p180 = pneg %p81
        %p181 = pneg %p110
        %p182 = pneg %p107
        %s183 = sand.u32 %s97, 1
        %s184 = scalar_lea.sflag [#allocation5], %s183
        %s185 = sand.u32 %s97, 1
        %s186 = smul.addr %s185, 4
        %s187 = scalar_lea.vmem [#allocation6], %s186
        %s188 = smul.u32 4, %s21
        %s189 = smul.u32 4, %s21
        %v190 = vld [vmem:[%s165] sm:$0xff]
        %v191 = vld [vmem:[%s165 + $0x8] sm:$0xff]
        %v192 = vld [vmem:[%s165 + $0x10] sm:$0xff]
        %v193 = vld [vmem:[%s165 + $0x18] sm:$0xff]
        %v194 = vld [vmem:[%s0] sm:$0xff]
        %196 = vset.pattern.permute.xlu0 0
        %197 = vperm.xlu0 %196, %v194
        %v198 = vpop.permute.xlu0 %197
        %v200 = vmul.f32 %v190, %v198
        %v201 = vmul.f32 %v191, %v198
        %v202 = vmul.f32 %v192, %v198
        %v203 = vmul.f32 %v193, %v198
        %v204 = vrot.slane %v200, 4
        %v205 = vadd.f32 %v200, %v204
        %v206 = vrot.slane %v205, 2
        %v207 = vadd.f32 %v205, %v206
        %v208 = vrot.slane %v207, 1
        %v209 = vadd.f32 %v207, %v208
        %v210 = vrot.slane %v201, 4
        %v211 = vadd.f32 %v201, %v210
        %v212 = vrot.slane %v211, 2
        %v213 = vadd.f32 %v211, %v212
        %v214 = vrot.slane %v213, 1
        %v215 = vadd.f32 %v213, %v214
        %v216 = vrot.slane %v202, 4
        %v217 = vadd.f32 %v202, %v216
        %v218 = vrot.slane %v217, 2
        %v219 = vadd.f32 %v217, %v218
        %v220 = vrot.slane %v219, 1
        %v221 = vadd.f32 %v219, %v220
        %v222 = vrot.slane %v203, 4
        %v223 = vadd.f32 %v203, %v222
        %v224 = vrot.slane %v223, 2
        %v225 = vadd.f32 %v223, %v224
        %v226 = vrot.slane %v225, 1
        %v227 = vadd.f32 %v225, %v226
        %s228 = sld [smem:[#allocation2]]
        %v229 = vstv %s228
        %v230 = vadd.f32 %v209, %v229
        %v231 = vadd.f32 %v215, %v229
        %v232 = vadd.f32 %v221, %v229
        %v233 = vadd.f32 %v227, %v229
        %v234 = vxor.u32 %v230, 2147483648
        %v235 = vxor.u32 %v231, 2147483648
        %v236 = vxor.u32 %v232, 2147483648
        %v237 = vxor.u32 %v233, 2147483648
        %v238 = vmul.f32 %v234, 1.442695
        %v239 = vpow.pop %v238
        %v240 = vmul.f32 %v235, 1.442695
        %v241 = vpow.pop %v240
        %v242 = vmul.f32 %v236, 1.442695
        %v243 = vpow.pop %v242
        %v244 = vmul.f32 %v237, 1.442695
        %v245 = vpow.pop %v244
        %v246 = vadd.f32 %v239, 1.0
        %v247 = vadd.f32 %v241, 1.0
        %v248 = vadd.f32 %v243, 1.0
        %v249 = vadd.f32 %v245, 1.0
        %v250 = vrcp.pop %v246
        %v251 = vmul.f32 1.0, %v250
        %v252 = vrcp.pop %v247
        %v253 = vmul.f32 1.0, %v252
        %v254 = vrcp.pop %v248
        %v255 = vmul.f32 1.0, %v254
        %v256 = vrcp.pop %v249
        %v257 = vmul.f32 1.0, %v256
        %v262 = vcombine.low %v251, %v253
        %v263 = vcombine.low %v255, %v257
        %v265 = vunpack.c.l.s4 1966171168
        %v266 = vunpack.c.0.s8 %v265
        %v267 = vlaneseq
        %v268 = vshrl.u32 %v267, 7
        %v269 = vsub.s32 %v266, %v268
        %v270 = vrot.slane %v262, %v269
        %v272 = vunpack.c.l.s4 1966171168
        %v273 = vunpack.c.0.s8 %v272
        %v274 = vlaneseq
        %v275 = vshrl.u32 %v274, 7
        %v276 = vsub.s32 %v273, %v275
        %v277 = vrot.slane %v263, %v276
        %v278 = vcombine.low %v270, %v277
        %v280 = vunpack.c.l.s4 1966171168
        %v281 = vunpack.c.0.s8 %v280
        %v282 = vlaneseq
        %v283 = vshrl.u32 %v282, 7
        %v284 = vsub.s32 %v281, %v283
        %v285 = vrot.slane %v278, %v284
        %v287 = vlaneseq
        %vm288 = vcmp.ge.s32.totalorder %v287, 0
        %vm289 = vcmp.lt.s32.totalorder %v287, 512
        %vm290 = vmand %vm288, %vm289
        %291 = vst.msk [vmem:[%s187] sm:$0xf] %vm290, %v285
        %s292 = sand.u32 %s97, 1
        %s293 = scalar_lea.sflag [#allocation5], %s292
        %s294 = sand.u32 %s97, 1
        %s295 = smul.addr %s294, 4
        %s296 = scalar_lea.vmem [#allocation6], %s295
        // Predicated region
        $region37: #{tpu_custom_call.1} parent=31 // pred_check
          %p297 = pneg %p107
        $region38: #{tpu_custom_call.1} parent=31 // pred_check_branch
          %299 = sbr.rel (%p297) target = $region40
        $region39: #{tpu_custom_call.1} parent=31 // pred_region
          %s300 = smul.u32 4, %s21
          %s302 = ssub.s32 64, 64
          %303 = vsyncadd %s293, %s302
          %s304 = smul.addr %s300, 16
          %s305 = scalar_lea.hbm %s3, %s304
          %s307 = sshll.u32 %s296, 4
          %s308 = int_to_ptr.vmem [resolvable:$true] %s307
          %310 = dma.vmem_to_hbm [thread:$0]  %s308, 64, %s305, %s293
        $region40: #{tpu_custom_call.1} parent=31 // pred_fallthru
          _
      $region32: #{tpu_custom_call.1} parent=5 // pred_fallthru
        _
      %p311 = scmp.le.s32.totalorder 2, %s16
      // Predicated region
      $region41: #{tpu_custom_call.1} parent=5 // pred_check
        %p312 = pneg %p311
      $region42: #{tpu_custom_call.1} parent=5 // pred_check_branch
        %314 = sbr.rel (%p312) target = $region44
      $region43: #{tpu_custom_call.1} parent=5 // pred_region
        %s315 = ssub.s32 %s16, 2
        // Predicated region
        $region45: #{tpu_custom_call.1} parent=43 // pred_check
          %p316 = pneg %p113
        $region46: #{tpu_custom_call.1} parent=43 // pred_check_branch
          %318 = sbr.rel (%p316) target = $region48
        $region47: #{tpu_custom_call.1} parent=43 // pred_region
          %s319 = sand.u32 %s98, 1
          %s320 = scalar_lea.sflag [#allocation5], %s319
          %s321 = sand.u32 %s98, 1
          %s322 = smul.addr %s321, 4
          %s323 = scalar_lea.vmem [#allocation6], %s322
          %324 = dma.done %s320, 64
        $region48: #{tpu_custom_call.1} parent=43 // pred_fallthru
          _
      $region44: #{tpu_custom_call.1} parent=5 // pred_fallthru
        _
    $region6: #{tpu_custom_call.1} parent=1 // loop_footer
      %s20 = sadd.s32 1, %s16
    $region7: #{tpu_custom_call.1} parent=1 // loop_footer_branch
      %15 = sbr.rel target = $region3
    $region8: #{tpu_custom_call.1} parent=1 // loop_exit
      _
    %325 = vsyncpa [#allocation4], 1
    %s326 = scalar_lea.sflag [#allocation4], 1
    %327 = vsyncpa %s326, 1
    %328 = vsyncpa [#allocation5], 1
    %s329 = scalar_lea.sflag [#allocation5], 1
    %330 = vsyncpa %s329, 1

</llo_original>
